<compile_context>
chip_gen: v7x
topology: tpu7x:2x2x1
jax: 0.10.0
libtpu: 0.0.40
codegen_flags: <defaults>
</compile_context>

<pallas_src>
import jax
import jax.numpy as jnp
from jax.experimental import pallas as pl
from jax.experimental.pallas import tpu as pltpu


def _round_up(n, m):
    return ((n + m - 1) // m) * m


def _mlp_kernel(x_ref, *refs):
    """Fused MLP over one batch tile.

    refs = (w0, b0, w1, b1, ..., w_head, b_head, out_ref)
      x_ref   : (TB, F)        native module layout (batch on sublanes)
      w_i     : (H_out, H_in)  PyTorch [out, in] layout
      b_i     : (H_out, 1)     broadcasts across the lane (batch) axis
      w_head  : (H, 1)         output head weight column (output_size == 1)
      b_head  : (1, 1)
      out_ref : (1, TB)        lane-dense output row (batch on lanes)
    """
    out_ref = refs[-1]
    param_refs = refs[:-1]
    n_linear = len(param_refs) // 2

    # ---- First hidden layer -------------------------------------------------
    # Contract the feature axis of the (TB, F) tile against dim 1 of W0.
    # Result is feature-major (H, TB): batch lands on the 128-wide lane axis,
    # so every subsequent tile and the output writeback are lane-dense.
    # Mosaic handles the relayout (a few XLU ops on an otherwise idle slot) —
    # no wrapper-side transpose / HBM round-trip on x.
    w0 = param_refs[0][...]                                   # (H, F)
    b0 = param_refs[1][...].astype(jnp.float32)               # (H, 1)
    x_tile = x_ref[...].astype(w0.dtype)                      # cast after DMA (bf16 path)
    z = jax.lax.dot_general(
        w0, x_tile,
        dimension_numbers=(((1,), (1,)), ((), ())),
        preferred_element_type=jnp.float32)                   # (H, TB)
    # Bias + ReLU in f32 on the VPU (Dropout is identity in eval mode).
    h = jnp.maximum(z + b0, 0.0)

    # ---- Remaining hidden layers: feature-major W @ h on the MXU ------------
    for i in range(1, n_linear - 1):
        w = param_refs[2 * i][...]                            # (H_out, H_in)
        b = param_refs[2 * i + 1][...].astype(jnp.float32)    # (H_out, 1)
        z = jnp.dot(w, h.astype(w.dtype), preferred_element_type=jnp.float32)
        h = jnp.maximum(z + b, 0.0)

    # ---- Output head (out_features == 1) ------------------------------------
    # Skip an N=1 MXU pass; VPU broadcast-multiply + XLU sublane reduction,
    # then sigmoid on the EUP.
    w_head = param_refs[-2][...].astype(jnp.float32)          # (H, 1)
    b_head = param_refs[-1][...].astype(jnp.float32)          # (1, 1)
    logits = jnp.sum(h * w_head, axis=0, keepdims=True) + b_head   # (1, TB)
    out_ref[...] = jax.nn.sigmoid(logits).astype(out_ref.dtype)


def mlp_forward(x, params, *, num_blocks=None, max_block_b=64 * 1024):
    """Forward pass.

    x:      (B, F) activations (module layout; left in its producer dtype).
    params: list of (W [out, in], b [out]) per Linear layer, PyTorch layout,
            last entry is the output head.  Pre-cast these once to bf16 for
            the bf16-storage path; x is cast in-kernel, never per-call here.
    num_blocks: batch tiles.  None -> 1 (v5e/v6e).  Use 2 on v7x so each of
            the two TensorCores gets one "parallel" grid step.
    max_block_b: cap on rows per tile so the double-buffered x stream stays
            well under the VMEM limit (relevant on v7x's 64 MiB physical VMEM).
    """
    B, F = x.shape
    out_size = params[-1][0].shape[0]
    assert out_size == 1, "VPU-reduce output head assumes output_size == 1"

    if num_blocks is None:
        # Small batches: one step (per-step overhead dominates).  Large
        # batches default to 2 so v7x's two TCs both get work; harmless on
        # single-TC v5e/v6e.
        num_blocks = 1 if B <= 1024 else 2

    block_b = min(_round_up(-(-B // num_blocks), 128), max_block_b)
    n_blocks = pl.cdiv(B, block_b)
    Bp = n_blocks * block_b   # output is lane-padded; x's last block is partial

    args = [x]
    in_specs = [pl.BlockSpec((block_b, F), lambda i: (i, 0))]
    for li, (w, b) in enumerate(params):
        if li < len(params) - 1:
            args += [w, b.reshape(-1, 1)]                 # (H_out,H_in), (H_out,1)
        else:
            args += [w.reshape(-1, 1), b.reshape(1, 1)]   # head: (H,1), (1,1)
        # Small grid-invariant parameters: full-tensor block + constant
        # index_map keeps them resident in VMEM for the whole grid.
        in_specs.append(pl.BlockSpec(args[-2].shape, lambda i: (0, 0)))
        in_specs.append(pl.BlockSpec(args[-1].shape, lambda i: (0, 0)))

    out_fm = pl.pallas_call(
        _mlp_kernel,
        out_shape=jax.ShapeDtypeStruct((1, Bp), jnp.float32),
        grid=(n_blocks,),
        in_specs=in_specs,
        out_specs=pl.BlockSpec((1, block_b), lambda i: (0, i)),
        compiler_params=pltpu.CompilerParams(
            dimension_semantics=("parallel",),
            # Explicit budget (we use << this): safe on v7x's 64 MiB VMEM.
            vmem_limit_bytes=32 * 1024 * 1024,
        ),
    )(*args)

    # Drop the padded lanes (garbage batch columns) and restore (B, 1).
    # NOTE: any downstream NaN checks must run on this sliced result.
    return out_fm[0, :B].reshape(B, out_size)


def init_mlp_params(key, input_size, num_layers, hidden_size, output_size):
    """nn.Linear-style init (U[-1/sqrt(fan_in), 1/sqrt(fan_in)]), PyTorch layout."""
    dims = [input_size] + [hidden_size] * num_layers + [output_size]
    params = []
    for fan_in, fan_out in zip(dims[:-1], dims[1:]):
        key, kw, kb = jax.random.split(key, 3)
        bound = 1.0 / (fan_in ** 0.5)
        w = jax.random.uniform(kw, (fan_out, fan_in), jnp.float32, -bound, bound)
        b = jax.random.uniform(kb, (fan_out,), jnp.float32, -bound, bound)
        params.append((w, b))
    return params


def mlp_reference(x, params):
    """Pure-JAX f32 reference (PyTorch-layout weights) for correctness checks."""
    h = x
    for i, (w, b) in enumerate(params):
        h = h @ w.astype(jnp.float32).T + b.astype(jnp.float32)
        if i < len(params) - 1:
            h = jnp.maximum(h, 0.0)
        else:
            h = jax.nn.sigmoid(h)
    return h


def mlp_reference_mixed(x, params_bf16):
    """Reference modelling the kernel's bf16-weight path exactly:
    bf16 matmul inputs, f32 accumulation, f32 bias/ReLU/sigmoid,
    f32 VPU output head."""
    h = x.astype(jnp.float32)
    for (w, b) in params_bf16[:-1]:
        z = jax.lax.dot_general(
            h.astype(jnp.bfloat16), w,
            dimension_numbers=(((1,), (1,)), ((), ())),
            preferred_element_type=jnp.float32)
        h = jnp.maximum(z + b.astype(jnp.float32), 0.0)
    w, b = params_bf16[-1]
    logits = h @ w.astype(jnp.float32).T + b.astype(jnp.float32)
    return jax.nn.sigmoid(logits)


if __name__ == "__main__":
    # input_size=32, num_layers=2 hidden Linears, hidden=32, output_size=1.
    INPUT_SIZE, NUM_LAYERS, HIDDEN, OUTPUT_SIZE = 32, 2, 32, 1
    B = 256  # small deterministic test batch

    key = jax.random.PRNGKey(0)
    key, kx = jax.random.split(key)
    x = jax.random.normal(kx, (B, INPUT_SIZE), dtype=jnp.float32)
    params = init_mlp_params(key, INPUT_SIZE, NUM_LAYERS, HIDDEN, OUTPUT_SIZE)

    # --- f32 path, 2 parallel blocks (v7x-style: one step per TensorCore) ---
    out = jax.block_until_ready(mlp_forward(x, params, num_blocks=2))
    ref = mlp_reference(x, params)
    assert out.shape == (B, OUTPUT_SIZE), out.shape
    assert jnp.allclose(out, ref, atol=1e-5, rtol=1e-5), (
        f"f32 mismatch: max abs err {float(jnp.max(jnp.abs(out - ref)))}"
    )

    # --- ragged batch, single block (in-kernel partial last block, no pad copy) ---
    xr = x[:37]
    out_r = jax.block_until_ready(mlp_forward(xr, params))
    ref_r = mlp_reference(xr, params)
    assert out_r.shape == (37, OUTPUT_SIZE)
    assert jnp.allclose(out_r, ref_r, atol=1e-5, rtol=1e-5), (
        f"ragged mismatch: max abs err {float(jnp.max(jnp.abs(out_r - ref_r)))}"
    )

    # --- bf16-stored weights (pre-cast once; x stays f32 in HBM, cast in-kernel) ---
    params_bf16 = [(w.astype(jnp.bfloat16), b.astype(jnp.bfloat16)) for (w, b) in params]
    out_bf = jax.block_until_ready(mlp_forward(x, params_bf16))
    ref_bf = mlp_reference_mixed(x, params_bf16)
    assert jnp.allclose(out_bf, ref_bf, atol=5e-3, rtol=0), (
        f"bf16 mismatch: max abs err {float(jnp.max(jnp.abs(out_bf - ref_bf)))}"
    )

    print("KERNEL_OK")
</pallas_src>

<mosaic_0001>
module attributes {stable_mosaic.version = 11 : i64} {
  func.func @_mlp_kernel(%arg0: i32, %arg1: memref<128x32xf32, #tpu.memory_space<vmem>>, %arg2: memref<32x32xf32, #tpu.memory_space<vmem>>, %arg3: memref<32x1xf32, #tpu.memory_space<vmem>>, %arg4: memref<32x32xf32, #tpu.memory_space<vmem>>, %arg5: memref<32x1xf32, #tpu.memory_space<vmem>>, %arg6: memref<32x1xf32, #tpu.memory_space<vmem>>, %arg7: memref<1x1xf32, #tpu.memory_space<vmem>>, %arg8: memref<1x128xf32, #tpu.memory_space<vmem>>) attributes {dimension_semantics = [#tpu.dimension_semantics<parallel>], iteration_bounds = array<i64: 2>, scalar_prefetch = 0 : i64, scratch_operands = 0 : i64, tpu.core_type = #tpu.core_type<tc>, window_params = [{transform_indices = @transform_0, window_bounds = array<i64: 128, 32>}, {pipeline_mode = #tpu.pipeline_mode<synchronous>, transform_indices = @transform_1, window_bounds = array<i64: 32, 32>}, {pipeline_mode = #tpu.pipeline_mode<synchronous>, transform_indices = @transform_2, window_bounds = array<i64: 32, 1>}, {pipeline_mode = #tpu.pipeline_mode<synchronous>, transform_indices = @transform_3, window_bounds = array<i64: 32, 32>}, {pipeline_mode = #tpu.pipeline_mode<synchronous>, transform_indices = @transform_4, window_bounds = array<i64: 32, 1>}, {pipeline_mode = #tpu.pipeline_mode<synchronous>, transform_indices = @transform_5, window_bounds = array<i64: 32, 1>}, {pipeline_mode = #tpu.pipeline_mode<synchronous>, transform_indices = @transform_6, window_bounds = array<i64: 1, 1>}, {transform_indices = @transform_7, window_bounds = array<i64: 1, 128>}]} {
    %c0 = arith.constant 0 : index
    %c0_0 = arith.constant 0 : index
    %0 = vector.load %arg2[%c0, %c0_0] : memref<32x32xf32, #tpu.memory_space<vmem>>, vector<32x32xf32>
    %c0_1 = arith.constant 0 : index
    %c0_2 = arith.constant 0 : index
    %1 = vector.load %arg3[%c0_1, %c0_2] : memref<32x1xf32, #tpu.memory_space<vmem>>, vector<32x1xf32>
    %c0_3 = arith.constant 0 : index
    %c0_4 = arith.constant 0 : index
    %2 = vector.load %arg1[%c0_3, %c0_4] : memref<128x32xf32, #tpu.memory_space<vmem>>, vector<128x32xf32>
    %cst = arith.constant dense<0.000000e+00> : vector<32x128xf32>
    %3 = tpu.matmul %0, %2, %cst {dimension_numbers = #tpu.dot_dimension_numbers<[1], [1], [0], [0], [0, 0, 1, 0], [], []>} : vector<32x32xf32>, vector<128x32xf32>, vector<32x128xf32> -> vector<32x128xf32>
    %4 = vector.broadcast %1 : vector<32x1xf32> to vector<32x128xf32>
    %5 = arith.addf %3, %4 : vector<32x128xf32>
    %cst_5 = arith.constant 0.000000e+00 : f32
    %6 = vector.broadcast %cst_5 : f32 to vector<32x128xf32>
    %7 = arith.maximumf %5, %6 : vector<32x128xf32>
    %c0_6 = arith.constant 0 : index
    %c0_7 = arith.constant 0 : index
    %8 = vector.load %arg4[%c0_6, %c0_7] : memref<32x32xf32, #tpu.memory_space<vmem>>, vector<32x32xf32>
    %c0_8 = arith.constant 0 : index
    %c0_9 = arith.constant 0 : index
    %9 = vector.load %arg5[%c0_8, %c0_9] : memref<32x1xf32, #tpu.memory_space<vmem>>, vector<32x1xf32>
    %cst_10 = arith.constant dense<0.000000e+00> : vector<32x128xf32>
    %10 = tpu.matmul %8, %7, %cst_10 {dimension_numbers = #tpu.dot_dimension_numbers<[1], [0], [0], [1], [0, 0, 1, 1], [], []>} : vector<32x32xf32>, vector<32x128xf32>, vector<32x128xf32> -> vector<32x128xf32>
    %11 = vector.broadcast %9 : vector<32x1xf32> to vector<32x128xf32>
    %12 = arith.addf %10, %11 : vector<32x128xf32>
    %cst_11 = arith.constant 0.000000e+00 : f32
    %13 = vector.broadcast %cst_11 : f32 to vector<32x128xf32>
    %14 = arith.maximumf %12, %13 : vector<32x128xf32>
    %c0_12 = arith.constant 0 : index
    %c0_13 = arith.constant 0 : index
    %15 = vector.load %arg6[%c0_12, %c0_13] : memref<32x1xf32, #tpu.memory_space<vmem>>, vector<32x1xf32>
    %c0_14 = arith.constant 0 : index
    %c0_15 = arith.constant 0 : index
    %16 = vector.load %arg7[%c0_14, %c0_15] : memref<1x1xf32, #tpu.memory_space<vmem>>, vector<1x1xf32>
    %17 = vector.broadcast %15 : vector<32x1xf32> to vector<32x128xf32>
    %18 = arith.mulf %14, %17 : vector<32x128xf32>
    %cst_16 = arith.constant dense<0.000000e+00> : vector<128xf32>
    %19 = vector.multi_reduction <add>, %18, %cst_16 [0] : vector<32x128xf32> to vector<128xf32>
    %20 = vector.shape_cast %19 : vector<128xf32> to vector<1x128xf32>
    %21 = vector.broadcast %16 : vector<1x1xf32> to vector<1x128xf32>
    %22 = arith.addf %20, %21 : vector<1x128xf32>
    %23 = arith.negf %22 : vector<1x128xf32>
    %24 = math.exp %23 : vector<1x128xf32>
    %cst_17 = arith.constant 1.000000e+00 : f32
    %25 = vector.broadcast %cst_17 : f32 to vector<1x128xf32>
    %26 = arith.addf %25, %24 : vector<1x128xf32>
    %27 = arith.divf %25, %26 : vector<1x128xf32>
    %c0_18 = arith.constant 0 : index
    %c0_19 = arith.constant 0 : index
    %28 = vector.load %arg8[%c0_18, %c0_19] : memref<1x128xf32, #tpu.memory_space<vmem>>, vector<1x128xf32>
    tpu.vector_store %arg8[%c0_18, %c0_19], %27 {strides = array<i32>} : memref<1x128xf32, #tpu.memory_space<vmem>>, vector<1x128xf32>,
    return
  }
  func.func @transform_0(%arg0: i32) -> (i32, i32) {
    %c0_i32 = arith.constant 0 : i32
    %c0_i32_0 = arith.constant 0 : i32
    return %arg0, %c0_i32 : i32, i32
  }
  func.func @transform_1(%arg0: i32) -> (i32, i32) {
    %c0_i32 = arith.constant 0 : i32
    %c0_i32_0 = arith.constant 0 : i32
    %c0_i32_1 = arith.constant 0 : i32
    return %c0_i32, %c0_i32_0 : i32, i32
  }
  func.func @transform_2(%arg0: i32) -> (i32, i32) {
    %c0_i32 = arith.constant 0 : i32
    %c0_i32_0 = arith.constant 0 : i32
    %c0_i32_1 = arith.constant 0 : i32
    return %c0_i32, %c0_i32_0 : i32, i32
  }
  func.func @transform_3(%arg0: i32) -> (i32, i32) {
    %c0_i32 = arith.constant 0 : i32
    %c0_i32_0 = arith.constant 0 : i32
    %c0_i32_1 = arith.constant 0 : i32
    return %c0_i32, %c0_i32_0 : i32, i32
  }
  func.func @transform_4(%arg0: i32) -> (i32, i32) {
    %c0_i32 = arith.constant 0 : i32
    %c0_i32_0 = arith.constant 0 : i32
    %c0_i32_1 = arith.constant 0 : i32
    return %c0_i32, %c0_i32_0 : i32, i32
  }
  func.func @transform_5(%arg0: i32) -> (i32, i32) {
    %c0_i32 = arith.constant 0 : i32
    %c0_i32_0 = arith.constant 0 : i32
    %c0_i32_1 = arith.constant 0 : i32
    return %c0_i32, %c0_i32_0 : i32, i32
  }
  func.func @transform_6(%arg0: i32) -> (i32, i32) {
    %c0_i32 = arith.constant 0 : i32
    %c0_i32_0 = arith.constant 0 : i32
    %c0_i32_1 = arith.constant 0 : i32
    return %c0_i32, %c0_i32_0 : i32, i32
  }
  func.func @transform_7(%arg0: i32) -> (i32, i32) {
    %c0_i32 = arith.constant 0 : i32
    %c0_i32_0 = arith.constant 0 : i32
    return %c0_i32, %arg0 : i32, i32
  }
}

</mosaic_0001>

<llo_original>
// kernel: tpu_custom_call.1
$region0: #{tpu_custom_call.1}
  #allocation0 [shape = 'u32[]', space=smem, size = 0x4, offset = 0x4, fixed_abs, tag = 'smem constant byte address 0x4 - core index']
  #allocation1 [shape = 'u32[144,128]{1,0:T(1,128)}', space=vmem, size = 0x12000, scoped, tag = 'internal scratch']
  #allocation2 [shape = 'f32[1,1]{1,0:T(1,128)S(1)}', space=vmem, size = 0x200, scoped, tag = 'scoped memory for tpu_custom_call.1']
  %s0 = inlined_call_operand.vmem [shape: f32[256,32], index: 0, kind: input, shape index: {}]
  %s1 = inlined_call_operand.vmem [shape: f32[32,32], index: 1, kind: input, shape index: {}]
  %s2 = inlined_call_operand.vmem [shape: f32[32,1], index: 2, kind: input, shape index: {}]
  %s3 = inlined_call_operand.vmem [shape: f32[32,32], index: 3, kind: input, shape index: {}]
  %s4 = inlined_call_operand.vmem [shape: f32[32,1], index: 4, kind: input, shape index: {}]
  %s5 = inlined_call_operand.vmem [shape: f32[32,1], index: 5, kind: input, shape index: {}]
  %s6 = inlined_call_operand.<no memory space> [shape: f32[1,1], index: 6, kind: input, shape index: {}]
  %s7 = inlined_call_operand.hbm [shape: f32[1,256], index: 7, kind: output, shape index: {}]
  %s8 = sld [smem:[#allocation0]]
  $region61: #{tpu_custom_call.1} parent=0
    _
  %s10 = ssub.s32 1, %s8
  %s11 = scalar_select 0, %s10, %s8
  %v12 = vstv %s6
  %13 = vst [vmem:[#allocation2] sm:$0x1] %v12
  $region1: #{tpu_custom_call.1} parent=0
    #allocation3 [shape = 'u8[1024]{0}', space=vmem, size = 0x400, scoped, tag = 'output window, operand 0']
    #allocation4 [shape = 's32[2]{0}', space=sflag, size = 0x8, scoped, tag = 'scoped memory for tpu_custom_call.1']
    %14 = vsyncpa [#allocation4], 0
    %s15 = scalar_lea.sflag [#allocation4], 1
    %16 = vsyncpa %s15, 0
    loop: start=0, step=1, limit=4
    $region2: #{tpu_custom_call.1} parent=1 // loop_pre_header
      _
    $region3: #{tpu_custom_call.1} parent=1 // loop_header
      %s18 = sphi 0, %s22
      %p19 = scmp.ge.s32.totalorder %s18, 4
      %s28 = sphi 0, %s30
      %s31 = sphi 0, %s28
      %s32 = sphi 0, %s31
      %s48 = sphi 0, %s32
      %s52 = sphi 0, %s52
      %s54 = sphi 0, %s52
      %s55 = sphi 0, %s54
      %s69 = sphi 0, %s55
      %s73 = sphi 0, %s73
      %s75 = sphi 0, %s73
      %s76 = sphi 0, %s75
      %s90 = sphi 0, %s76
      %s94 = sphi 0, %s94
      %s96 = sphi 0, %s94
      %s97 = sphi 0, %s96
      %s111 = sphi 0, %s97
      %s115 = sphi 0, %s115
      %s117 = sphi 0, %s115
      %s118 = sphi 0, %s117
      %s132 = sphi 0, %s118
      %s136 = sphi 0, %s136
      %s138 = sphi 0, %s136
      %s139 = sphi 0, %s138
      %s153 = sphi 0, %s139
      %s157 = sphi 0, %s157
      %s159 = sphi 0, %s157
      %s160 = sphi 0, %s159
      %s174 = sphi 0, %s160
      %s180 = sphi 0, %s182
      %s183 = sphi 0, %s180
      %s184 = sphi 0, %s183
      %s200 = sphi 0, %s184
    $region4: #{tpu_custom_call.1} parent=1 // loop_header_branch
      %21 = sbr.rel (%p19) target = $region8
    $region5: #{tpu_custom_call.1} parent=1 // loop_body
      %s23 = ssub.s32 %s18, 1
      %s24 = ssub.s32 %s18, 2
      %s25 = sadd.s32 %s18, 1
      %s26 = ssub.s32 %s18, %s25
      %p27 = scmp.eq.s32.totalorder %s26, 0
      %s29 = sadd.s32 %s28, 1
      %s30 = scalar_select %p27, %s28, %s29
      %p33 = pneg %p27
      %p34 = scmp.eq.s32.totalorder %s18, 1
      %p35 = por %p33, %p34
      %p36 = scmp.ne.s32.totalorder %s28, %s31
      %p37 = scmp.eq.s32.totalorder %s18, 0
      %p38 = por %p36, %p37
      %p39 = scmp.ne.s32.totalorder %s28, %s31
      %p40 = scmp.eq.s32.totalorder %s23, 1
      %p41 = por %p39, %p40
      %p42 = scmp.ne.s32.totalorder %s31, %s32
      %p43 = scmp.eq.s32.totalorder %s23, 0
      %p44 = por %p42, %p43
      %p45 = scmp.ne.s32.totalorder %s31, %s32
      %p46 = scmp.eq.s32.totalorder %s24, 1
      %p47 = por %p45, %p46
      %p49 = scmp.ne.s32.totalorder %s32, %s48
      %p50 = scmp.eq.s32.totalorder %s24, 0
      %p51 = por %p49, %p50
      %s53 = sadd.s32 %s52, 1
      %p56 = scmp.eq.s32.totalorder %s18, 1
      %p57 = scmp.ne.s32.totalorder %s52, %s54
      %p58 = scmp.eq.s32.totalorder %s18, 0
      %p59 = por %p57, %p58
      %p60 = scmp.ne.s32.totalorder %s52, %s54
      %p61 = scmp.eq.s32.totalorder %s23, 1
      %p62 = por %p60, %p61
      %p63 = scmp.ne.s32.totalorder %s54, %s55
      %p64 = scmp.eq.s32.totalorder %s23, 0
      %p65 = por %p63, %p64
      %p66 = scmp.ne.s32.totalorder %s54, %s55
      %p67 = scmp.eq.s32.totalorder %s24, 1
      %p68 = por %p66, %p67
      %p70 = scmp.ne.s32.totalorder %s55, %s69
      %p71 = scmp.eq.s32.totalorder %s24, 0
      %p72 = por %p70, %p71
      %s74 = sadd.s32 %s73, 1
      %p77 = scmp.eq.s32.totalorder %s18, 1
      %p78 = scmp.ne.s32.totalorder %s73, %s75
      %p79 = scmp.eq.s32.totalorder %s18, 0
      %p80 = por %p78, %p79
      %p81 = scmp.ne.s32.totalorder %s73, %s75
      %p82 = scmp.eq.s32.totalorder %s23, 1
      %p83 = por %p81, %p82
      %p84 = scmp.ne.s32.totalorder %s75, %s76
      %p85 = scmp.eq.s32.totalorder %s23, 0
      %p86 = por %p84, %p85
      %p87 = scmp.ne.s32.totalorder %s75, %s76
      %p88 = scmp.eq.s32.totalorder %s24, 1
      %p89 = por %p87, %p88
      %p91 = scmp.ne.s32.totalorder %s76, %s90
      %p92 = scmp.eq.s32.totalorder %s24, 0
      %p93 = por %p91, %p92
      %s95 = sadd.s32 %s94, 1
      %p98 = scmp.eq.s32.totalorder %s18, 1
      %p99 = scmp.ne.s32.totalorder %s94, %s96
      %p100 = scmp.eq.s32.totalorder %s18, 0
      %p101 = por %p99, %p100
      %p102 = scmp.ne.s32.totalorder %s94, %s96
      %p103 = scmp.eq.s32.totalorder %s23, 1
      %p104 = por %p102, %p103
      %p105 = scmp.ne.s32.totalorder %s96, %s97
      %p106 = scmp.eq.s32.totalorder %s23, 0
      %p107 = por %p105, %p106
      %p108 = scmp.ne.s32.totalorder %s96, %s97
      %p109 = scmp.eq.s32.totalorder %s24, 1
      %p110 = por %p108, %p109
      %p112 = scmp.ne.s32.totalorder %s97, %s111
      %p113 = scmp.eq.s32.totalorder %s24, 0
      %p114 = por %p112, %p113
      %s116 = sadd.s32 %s115, 1
      %p119 = scmp.eq.s32.totalorder %s18, 1
      %p120 = scmp.ne.s32.totalorder %s115, %s117
      %p121 = scmp.eq.s32.totalorder %s18, 0
      %p122 = por %p120, %p121
      %p123 = scmp.ne.s32.totalorder %s115, %s117
      %p124 = scmp.eq.s32.totalorder %s23, 1
      %p125 = por %p123, %p124
      %p126 = scmp.ne.s32.totalorder %s117, %s118
      %p127 = scmp.eq.s32.totalorder %s23, 0
      %p128 = por %p126, %p127
      %p129 = scmp.ne.s32.totalorder %s117, %s118
      %p130 = scmp.eq.s32.totalorder %s24, 1
      %p131 = por %p129, %p130
      %p133 = scmp.ne.s32.totalorder %s118, %s132
      %p134 = scmp.eq.s32.totalorder %s24, 0
      %p135 = por %p133, %p134
      %s137 = sadd.s32 %s136, 1
      %p140 = scmp.eq.s32.totalorder %s18, 1
      %p141 = scmp.ne.s32.totalorder %s136, %s138
      %p142 = scmp.eq.s32.totalorder %s18, 0
      %p143 = por %p141, %p142
      %p144 = scmp.ne.s32.totalorder %s136, %s138
      %p145 = scmp.eq.s32.totalorder %s23, 1
      %p146 = por %p144, %p145
      %p147 = scmp.ne.s32.totalorder %s138, %s139
      %p148 = scmp.eq.s32.totalorder %s23, 0
      %p149 = por %p147, %p148
      %p150 = scmp.ne.s32.totalorder %s138, %s139
      %p151 = scmp.eq.s32.totalorder %s24, 1
      %p152 = por %p150, %p151
      %p154 = scmp.ne.s32.totalorder %s139, %s153
      %p155 = scmp.eq.s32.totalorder %s24, 0
      %p156 = por %p154, %p155
      %s158 = sadd.s32 %s157, 1
      %p161 = scmp.eq.s32.totalorder %s18, 1
      %p162 = scmp.ne.s32.totalorder %s157, %s159
      %p163 = scmp.eq.s32.totalorder %s18, 0
      %p164 = por %p162, %p163
      %p165 = scmp.ne.s32.totalorder %s157, %s159
      %p166 = scmp.eq.s32.totalorder %s23, 1
      %p167 = por %p165, %p166
      %p168 = scmp.ne.s32.totalorder %s159, %s160
      %p169 = scmp.eq.s32.totalorder %s23, 0
      %p170 = por %p168, %p169
      %p171 = scmp.ne.s32.totalorder %s159, %s160
      %p172 = scmp.eq.s32.totalorder %s24, 1
      %p173 = por %p171, %p172
      %p175 = scmp.ne.s32.totalorder %s160, %s174
      %p176 = scmp.eq.s32.totalorder %s24, 0
      %p177 = por %p175, %p176
      %s178 = ssub.s32 %s18, %s25
      %p179 = scmp.eq.s32.totalorder %s178, 0
      %s181 = sadd.s32 %s180, 1
      %s182 = scalar_select %p179, %s180, %s181
      %p185 = pneg %p179
      %p186 = scmp.eq.s32.totalorder %s18, 1
      %p187 = por %p185, %p186
      %p188 = scmp.ne.s32.totalorder %s180, %s183
      %p189 = scmp.eq.s32.totalorder %s18, 0
      %p190 = por %p188, %p189
      %p191 = scmp.ne.s32.totalorder %s180, %s183
      %p192 = scmp.eq.s32.totalorder %s23, 1
      %p193 = por %p191, %p192
      %p194 = scmp.ne.s32.totalorder %s183, %s184
      %p195 = scmp.eq.s32.totalorder %s23, 0
      %p196 = por %p194, %p195
      %p197 = scmp.ne.s32.totalorder %s183, %s184
      %p198 = scmp.eq.s32.totalorder %s24, 1
      %p199 = por %p197, %p198
      %p201 = scmp.ne.s32.totalorder %s184, %s200
      %p202 = scmp.eq.s32.totalorder %s24, 0
      %p203 = por %p201, %p202
      %p204 = scmp.le.s32.totalorder 1, %s18
      %p205 = scmp.lt.s32.totalorder %s18, 3
      %p206 = pnand %p204, %p205
      %p207 = pneg %p206
      // Predicated region
      $region9: #{tpu_custom_call.1} parent=5 // pred_check
        _
      $region10: #{tpu_custom_call.1} parent=5 // pred_check_branch
        %209 = sbr.rel (%p206) target = $region12
      $region11: #{tpu_custom_call.1} parent=5 // pred_region
        %s210 = ssub.s32 %s18, 1
        // Predicated region
        $region13: #{tpu_custom_call.1} parent=11 // pred_check
          %p211 = pneg %p65
        $region14: #{tpu_custom_call.1} parent=11 // pred_check_branch
          %213 = sbr.rel (%p211) target = $region16
        $region15: #{tpu_custom_call.1} parent=11 // pred_region
          _
        $region16: #{tpu_custom_call.1} parent=11 // pred_fallthru
          _
        // Predicated region
        $region17: #{tpu_custom_call.1} parent=11 // pred_check
          %p214 = pneg %p86
        $region18: #{tpu_custom_call.1} parent=11 // pred_check_branch
          %216 = sbr.rel (%p214) target = $region20
        $region19: #{tpu_custom_call.1} parent=11 // pred_region
          _
        $region20: #{tpu_custom_call.1} parent=11 // pred_fallthru
          _
        // Predicated region
        $region21: #{tpu_custom_call.1} parent=11 // pred_check
          %p217 = pneg %p107
        $region22: #{tpu_custom_call.1} parent=11 // pred_check_branch
          %219 = sbr.rel (%p217) target = $region24
        $region23: #{tpu_custom_call.1} parent=11 // pred_region
          _
        $region24: #{tpu_custom_call.1} parent=11 // pred_fallthru
          _
        // Predicated region
        $region25: #{tpu_custom_call.1} parent=11 // pred_check
          %p220 = pneg %p128
        $region26: #{tpu_custom_call.1} parent=11 // pred_check_branch
          %222 = sbr.rel (%p220) target = $region28
        $region27: #{tpu_custom_call.1} parent=11 // pred_region
          _
        $region28: #{tpu_custom_call.1} parent=11 // pred_fallthru
          _
        // Predicated region
        $region29: #{tpu_custom_call.1} parent=11 // pred_check
          %p223 = pneg %p149
        $region30: #{tpu_custom_call.1} parent=11 // pred_check_branch
          %225 = sbr.rel (%p223) target = $region32
        $region31: #{tpu_custom_call.1} parent=11 // pred_region
          _
        $region32: #{tpu_custom_call.1} parent=11 // pred_fallthru
          _
        // Predicated region
        $region33: #{tpu_custom_call.1} parent=11 // pred_check
          %p226 = pneg %p170
        $region34: #{tpu_custom_call.1} parent=11 // pred_check_branch
          %228 = sbr.rel (%p226) target = $region36
        $region35: #{tpu_custom_call.1} parent=11 // pred_region
          _
        $region36: #{tpu_custom_call.1} parent=11 // pred_fallthru
          _
      $region12: #{tpu_custom_call.1} parent=5 // pred_fallthru
        _
      %p229 = scmp.lt.s32.totalorder %s18, 2
      // Predicated region
      $region37: #{tpu_custom_call.1} parent=5 // pred_check
        %p230 = pneg %p229
      $region38: #{tpu_custom_call.1} parent=5 // pred_check_branch
        %232 = sbr.rel (%p230) target = $region40
      $region39: #{tpu_custom_call.1} parent=5 // pred_region
        // Predicated region
        $region41: #{tpu_custom_call.1} parent=39 // pred_check
          %p233 = pneg %p38
        $region42: #{tpu_custom_call.1} parent=39 // pred_check_branch
          %235 = sbr.rel (%p233) target = $region44
        $region43: #{tpu_custom_call.1} parent=39 // pred_region
          %s236 = smul.u32 16, %s18
          %p237 = scmp.lt.s32.totalorder %s236, 31
          %s238 = scalar_select %p237, %s236, 31
          %s239 = smul.addr %s238, 8
          %s240 = scalar_lea.vmem %s0, %s239
          %s241 = smul.u32 16, %s18
        $region44: #{tpu_custom_call.1} parent=39 // pred_fallthru
          _
      $region40: #{tpu_custom_call.1} parent=5 // pred_fallthru
        _
      %p242 = scmp.le.s32.totalorder 1, %s18
      %p243 = scmp.lt.s32.totalorder %s18, 3
      %p244 = pnand %p242, %p243
      %p245 = pneg %p244
      // Predicated region
      $region45: #{tpu_custom_call.1} parent=5 // pred_check
        _
      $region46: #{tpu_custom_call.1} parent=5 // pred_check_branch
        %247 = sbr.rel (%p244) target = $region48
      $region47: #{tpu_custom_call.1} parent=5 // pred_region
        %s248 = ssub.s32 %s18, 1
        %s249 = smul.u32 16, %s23
        %p250 = scmp.lt.s32.totalorder %s249, 31
        %s251 = scalar_select %p250, %s249, 31
        %s252 = smul.addr %s251, 8
        %s253 = scalar_lea.vmem %s0, %s252
        %p254 = pneg %p44
        %p255 = pneg %p41
        %p256 = pneg %p65
        %p257 = pneg %p62
        %p258 = pneg %p86
        %p259 = pneg %p83
        %p260 = pneg %p107
        %p261 = pneg %p104
        %p262 = pneg %p128
        %p263 = pneg %p125
        %p264 = pneg %p149
        %p265 = pneg %p146
        %p266 = pneg %p170
        %p267 = pneg %p167
        %p268 = pneg %p196
        %p269 = pneg %p193
        %s270 = sand.u32 %s183, 1
        %s271 = scalar_lea.sflag [#allocation4], %s270
        %s272 = sand.u32 %s183, 1
        %s273 = scalar_lea.vmem [#allocation3], %s272
        %s274 = smul.u32 16, %s23
        %p275 = scmp.lt.s32.totalorder %s274, 31
        %s276 = scalar_select %p275, %s274, 31
        %s277 = smul.addr %s276, 8
        %s278 = scalar_lea.vmem %s0, %s277
        %s279 = smul.u32 16, %s23
        %v280 = vld [vmem:[%s1] sm:$0xff]
        %v281 = vld [vmem:[%s1 + $0x8] sm:$0xff]
        %v282 = vld [vmem:[%s1 + $0x10] sm:$0xff]
        %v283 = vld [vmem:[%s1 + $0x18] sm:$0xff]
        %v284 = vld [vmem:[%s2] sm:$0xff]
        %v285 = vld [vmem:[%s2 + $0x8] sm:$0xff]
        %v286 = vld [vmem:[%s2 + $0x10] sm:$0xff]
        %v287 = vld [vmem:[%s2 + $0x18] sm:$0xff]
        %v288 = vld [vmem:[%s278] sm:$0xff]
        %v289 = vld [vmem:[%s278 + $0x8] sm:$0xff]
        %v290 = vld [vmem:[%s278 + $0x10] sm:$0xff]
        %v291 = vld [vmem:[%s278 + $0x18] sm:$0xff]
        %v292 = vld [vmem:[%s278 + $0x20] sm:$0xff]
        %v293 = vld [vmem:[%s278 + $0x28] sm:$0xff]
        %v294 = vld [vmem:[%s278 + $0x30] sm:$0xff]
        %v295 = vld [vmem:[%s278 + $0x38] sm:$0xff]
        %v296 = vld [vmem:[%s278 + $0x40] sm:$0xff]
        %v297 = vld [vmem:[%s278 + $0x48] sm:$0xff]
        %v298 = vld [vmem:[%s278 + $0x50] sm:$0xff]
        %v299 = vld [vmem:[%s278 + $0x58] sm:$0xff]
        %v300 = vld [vmem:[%s278 + $0x60] sm:$0xff]
        %v301 = vld [vmem:[%s278 + $0x68] sm:$0xff]
        %v302 = vld [vmem:[%s278 + $0x70] sm:$0xff]
        %v303 = vld [vmem:[%s278 + $0x78] sm:$0xff]
        %305 = vset.pattern.permute.xlu0 0
        %306 = vperm.xlu0 %305, %v284
        %v307 = vpop.permute.xlu0 %306
        %310 = vset.pattern.permute.xlu0 0
        %311 = vperm.xlu0 %310, %v285
        %v312 = vpop.permute.xlu0 %311
        %315 = vset.pattern.permute.xlu0 0
        %316 = vperm.xlu0 %315, %v286
        %v317 = vpop.permute.xlu0 %316
        %320 = vset.pattern.permute.xlu0 0
        %321 = vperm.xlu0 %320, %v287
        %v322 = vpop.permute.xlu0 %321
        %vm324 = vcmask 261120
        %v326 = vsel %vm324, %v280, 0
        %v329 = vsel %vm324, %v281, 0
        %v332 = vsel %vm324, %v282, 0
        %v335 = vsel %vm324, %v283, 0
        %v338 = vsel %vm324, %v288, 0
        %v341 = vsel %vm324, %v289, 0
        %v344 = vsel %vm324, %v290, 0
        %v347 = vsel %vm324, %v291, 0
        %v350 = vsel %vm324, %v292, 0
        %v353 = vsel %vm324, %v293, 0
        %v356 = vsel %vm324, %v294, 0
        %v359 = vsel %vm324, %v295, 0
        %v362 = vsel %vm324, %v296, 0
        %v365 = vsel %vm324, %v297, 0
        %v368 = vsel %vm324, %v298, 0
        %v371 = vsel %vm324, %v299, 0
        %v374 = vsel %vm324, %v300, 0
        %v377 = vsel %vm324, %v301, 0
        %v380 = vsel %vm324, %v302, 0
        %v383 = vsel %vm324, %v303, 0
        %385 = vmatprep.subr.mxu0 0.0
        %386 = vmatpush1.xpose.msra.mxu0 %v338
        %387 = vmatprep.subr.mxu0 0.0
        %388 = vmatpush1.xpose.msra.mxu0 %v341
        %389 = vmatprep.subr.mxu0 0.0
        %390 = vmatpush1.xpose.msra.mxu0 %v344
        %391 = vmatprep.subr.mxu0 0.0
        %392 = vmatpush1.xpose.msra.mxu0 %v347
        %393 = vmatprep.subr.mxu0 0.0
        %394 = vmatpush1.xpose.msra.mxu0 %v350
        %395 = vmatprep.subr.mxu0 0.0
        %396 = vmatpush1.xpose.msra.mxu0 %v353
        %397 = vmatprep.subr.mxu0 0.0
        %398 = vmatpush1.xpose.msra.mxu0 %v356
        %399 = vmatprep.subr.mxu0 0.0
        %400 = vmatpush1.xpose.msra.mxu0 %v359
        %401 = vmatprep.subr.mxu0 0.0
        %402 = vmatpush1.xpose.msra.mxu0 %v362
        %403 = vmatprep.subr.mxu0 0.0
        %404 = vmatpush1.xpose.msra.mxu0 %v365
        %405 = vmatprep.subr.mxu0 0.0
        %406 = vmatpush1.xpose.msra.mxu0 %v368
        %407 = vmatprep.subr.mxu0 0.0
        %408 = vmatpush1.xpose.msra.mxu0 %v371
        %409 = vmatprep.subr.mxu0 0.0
        %410 = vmatpush1.xpose.msra.mxu0 %v374
        %411 = vmatprep.subr.mxu0 0.0
        %412 = vmatpush1.xpose.msra.mxu0 %v377
        %413 = vmatprep.subr.mxu0 0.0
        %414 = vmatpush1.xpose.msra.mxu0 %v380
        %415 = vmatprep.subr.mxu0 0.0
        %416 = vmatpush1.xpose.msra.mxu0 %v383
        %417 = vmatprep.subr.mxu0 0.0
        %418 = vmatpush1.xpose.msra.mxu0 0.0
        %419 = vmatprep.subr.mxu0 0.0
        %420 = vmatpush1.xpose.msra.mxu0 0.0
        %421 = vmatprep.subr.mxu0 0.0
        %422 = vmatpush1.xpose.msra.mxu0 0.0
        %423 = vmatprep.subr.mxu0 0.0
        %424 = vmatpush1.xpose.msra.mxu0 0.0
        %425 = vmatprep.subr.mxu0 0.0
        %426 = vmatpush1.xpose.msra.mxu0 0.0
        %427 = vmatprep.subr.mxu0 0.0
        %428 = vmatpush1.xpose.msra.mxu0 0.0
        %429 = vmatprep.subr.mxu0 0.0
        %430 = vmatpush1.xpose.msra.mxu0 0.0
        %431 = vmatprep.subr.mxu0 0.0
        %432 = vmatpush1.xpose.msra.mxu0 0.0
        %433 = vmatprep.subr.mxu0 0.0
        %434 = vmatpush1.xpose.msra.mxu0 0.0
        %435 = vmatprep.subr.mxu0 0.0
        %436 = vmatpush1.xpose.msra.mxu0 0.0
        %437 = vmatprep.subr.mxu0 0.0
        %438 = vmatpush1.xpose.msra.mxu0 0.0
        %439 = vmatprep.subr.mxu0 0.0
        %440 = vmatpush1.xpose.msra.mxu0 0.0
        %441 = vmatprep.subr.mxu0 0.0
        %442 = vmatpush1.xpose.msra.mxu0 0.0
        %443 = vmatprep.subr.mxu0 0.0
        %444 = vmatpush1.xpose.msra.mxu0 0.0
        %445 = vmatprep.subr.mxu0 0.0
        %446 = vmatpush1.xpose.msra.mxu0 0.0
        %447 = vmatprep.subr.mxu0 0.0
        %448 = vmatpush1.xpose.msra.mxu0 0.0
        %449 = vmatprep.mubr.f32.mxu0 0.0
        %450 = vmatmul.mubr.f32.gmra.mrb[0].mxu0 %v326
        %v451 = vpop.f32.mrb[0].mxu0
        %v452 = vadd.f32 %v307, %v451
        %v453 = vpop.f32.mrb[0].mxu0
        %454 = vmatprep.mubr.f32.mxu0 0.0
        %455 = vmatmul.mubr.f32.gmra.mrb[0].mxu0 %v329
        %v456 = vpop.f32.mrb[0].mxu0
        %v457 = vadd.f32 %v312, %v456
        %v458 = vpop.f32.mrb[0].mxu0
        %459 = vmatprep.mubr.f32.mxu0 0.0
        %460 = vmatmul.mubr.f32.gmra.mrb[0].mxu0 %v332
        %v461 = vpop.f32.mrb[0].mxu0
        %v462 = vadd.f32 %v317, %v461
        %v463 = vpop.f32.mrb[0].mxu0
        %464 = vmatprep.mubr.f32.mxu0 0.0
        %465 = vmatmul.mubr.f32.gmra.mrb[0].mxu0 %v335
        %v466 = vpop.f32.mrb[0].mxu0
        %v467 = vadd.f32 %v322, %v466
        %v468 = vpop.f32.mrb[0].mxu0
        %469 = vdwg.mxu0
        %v470 = vmax.f32 %v452, 0.0
        %v471 = vmax.f32 %v457, 0.0
        %v472 = vmax.f32 %v462, 0.0
        %v473 = vmax.f32 %v467, 0.0
        %v474 = vld [vmem:[%s3] sm:$0xff]
        %v475 = vld [vmem:[%s3 + $0x8] sm:$0xff]
        %v476 = vld [vmem:[%s3 + $0x10] sm:$0xff]
        %v477 = vld [vmem:[%s3 + $0x18] sm:$0xff]
        %v478 = vld [vmem:[%s4] sm:$0xff]
        %v479 = vld [vmem:[%s4 + $0x8] sm:$0xff]
        %v480 = vld [vmem:[%s4 + $0x10] sm:$0xff]
        %v481 = vld [vmem:[%s4 + $0x18] sm:$0xff]
        %483 = vset.pattern.permute.xlu0 0
        %484 = vperm.xlu0 %483, %v478
        %v485 = vpop.permute.xlu0 %484
        %488 = vset.pattern.permute.xlu0 0
        %489 = vperm.xlu0 %488, %v479
        %v490 = vpop.permute.xlu0 %489
        %493 = vset.pattern.permute.xlu0 0
        %494 = vperm.xlu0 %493, %v480
        %v495 = vpop.permute.xlu0 %494
        %498 = vset.pattern.permute.xlu0 0
        %499 = vperm.xlu0 %498, %v481
        %v500 = vpop.permute.xlu0 %499
        %v503 = vsel %vm324, %v474, 0
        %v506 = vsel %vm324, %v475, 0
        %v509 = vsel %vm324, %v476, 0
        %v512 = vsel %vm324, %v477, 0
        %514 = vmatprep.subr.mxu0 0.0
        %515 = vmatpush1.msra.mxu0 %v470
        %516 = vmatprep.subr.mxu0 0.0
        %517 = vmatpush1.msra.mxu0 %v471
        %518 = vmatprep.subr.mxu0 0.0
        %519 = vmatpush1.msra.mxu0 %v472
        %520 = vmatprep.subr.mxu0 0.0
        %521 = vmatpush1.msra.mxu0 %v473
        %522 = vmatprep.subr.mxu0 0.0
        %523 = vmatpush1.msra.mxu0 0.0
        %524 = vmatprep.subr.mxu0 0.0
        %525 = vmatpush1.msra.mxu0 0.0
        %526 = vmatprep.subr.mxu0 0.0
        %527 = vmatpush1.msra.mxu0 0.0
        %528 = vmatprep.subr.mxu0 0.0
        %529 = vmatpush1.msra.mxu0 0.0
        %530 = vmatprep.subr.mxu0 0.0
        %531 = vmatpush1.msra.mxu0 0.0
        %532 = vmatprep.subr.mxu0 0.0
        %533 = vmatpush1.msra.mxu0 0.0
        %534 = vmatprep.subr.mxu0 0.0
        %535 = vmatpush1.msra.mxu0 0.0
        %536 = vmatprep.subr.mxu0 0.0
        %537 = vmatpush1.msra.mxu0 0.0
        %538 = vmatprep.subr.mxu0 0.0
        %539 = vmatpush1.msra.mxu0 0.0
        %540 = vmatprep.subr.mxu0 0.0
        %541 = vmatpush1.msra.mxu0 0.0
        %542 = vmatprep.subr.mxu0 0.0
        %543 = vmatpush1.msra.mxu0 0.0
        %544 = vmatprep.subr.mxu0 0.0
        %545 = vmatpush1.msra.mxu0 0.0
        %546 = vmatprep.subr.mxu0 0.0
        %547 = vmatpush1.msra.mxu0 0.0
        %548 = vmatprep.subr.mxu0 0.0
        %549 = vmatpush1.msra.mxu0 0.0
        %550 = vmatprep.subr.mxu0 0.0
        %551 = vmatpush1.msra.mxu0 0.0
        %552 = vmatprep.subr.mxu0 0.0
        %553 = vmatpush1.msra.mxu0 0.0
        %554 = vmatprep.subr.mxu0 0.0
        %555 = vmatpush1.msra.mxu0 0.0
        %556 = vmatprep.subr.mxu0 0.0
        %557 = vmatpush1.msra.mxu0 0.0
        %558 = vmatprep.subr.mxu0 0.0
        %559 = vmatpush1.msra.mxu0 0.0
        %560 = vmatprep.subr.mxu0 0.0
        %561 = vmatpush1.msra.mxu0 0.0
        %562 = vmatprep.subr.mxu0 0.0
        %563 = vmatpush1.msra.mxu0 0.0
        %564 = vmatprep.subr.mxu0 0.0
        %565 = vmatpush1.msra.mxu0 0.0
        %566 = vmatprep.subr.mxu0 0.0
        %567 = vmatpush1.msra.mxu0 0.0
        %568 = vmatprep.subr.mxu0 0.0
        %569 = vmatpush1.msra.mxu0 0.0
        %570 = vmatprep.subr.mxu0 0.0
        %571 = vmatpush1.msra.mxu0 0.0
        %572 = vmatprep.subr.mxu0 0.0
        %573 = vmatpush1.msra.mxu0 0.0
        %574 = vmatprep.subr.mxu0 0.0
        %575 = vmatpush1.msra.mxu0 0.0
        %576 = vmatprep.subr.mxu0 0.0
        %577 = vmatpush1.msra.mxu0 0.0
        %578 = vmatprep.mubr.f32.mxu0 0.0
        %579 = vmatmul.mubr.f32.gmra.mrb[0].mxu0 %v503
        %v580 = vpop.f32.mrb[0].mxu0
        %v581 = vadd.f32 %v485, %v580
        %v582 = vpop.f32.mrb[0].mxu0
        %583 = vmatprep.mubr.f32.mxu0 0.0
        %584 = vmatmul.mubr.f32.gmra.mrb[0].mxu0 %v506
        %v585 = vpop.f32.mrb[0].mxu0
        %v586 = vadd.f32 %v490, %v585
        %v587 = vpop.f32.mrb[0].mxu0
        %588 = vmatprep.mubr.f32.mxu0 0.0
        %589 = vmatmul.mubr.f32.gmra.mrb[0].mxu0 %v509
        %v590 = vpop.f32.mrb[0].mxu0
        %v591 = vadd.f32 %v495, %v590
        %v592 = vpop.f32.mrb[0].mxu0
        %593 = vmatprep.mubr.f32.mxu0 0.0
        %594 = vmatmul.mubr.f32.gmra.mrb[0].mxu0 %v512
        %v595 = vpop.f32.mrb[0].mxu0
        %v596 = vadd.f32 %v500, %v595
        %v597 = vpop.f32.mrb[0].mxu0
        %598 = vdwg.mxu0
        %v599 = vmax.f32 %v581, 0.0
        %v600 = vmax.f32 %v586, 0.0
        %v601 = vmax.f32 %v591, 0.0
        %v602 = vmax.f32 %v596, 0.0
        %v603 = vld [vmem:[%s5] sm:$0xff]
        %v604 = vld [vmem:[%s5 + $0x8] sm:$0xff]
        %v605 = vld [vmem:[%s5 + $0x10] sm:$0xff]
        %v606 = vld [vmem:[%s5 + $0x18] sm:$0xff]
        %v607 = vld [vmem:[#allocation2] sm:$0x1]
        %609 = vset.pattern.permute.xlu0 0
        %610 = vperm.xlu0 %609, %v603
        %v611 = vpop.permute.xlu0 %610
        %614 = vset.pattern.permute.xlu0 0
        %615 = vperm.xlu0 %614, %v604
        %v616 = vpop.permute.xlu0 %615
        %619 = vset.pattern.permute.xlu0 0
        %620 = vperm.xlu0 %619, %v605
        %v621 = vpop.permute.xlu0 %620
        %624 = vset.pattern.permute.xlu0 0
        %625 = vperm.xlu0 %624, %v606
        %v626 = vpop.permute.xlu0 %625
        %v628 = vmul.f32 %v599, %v611
        %v629 = vmul.f32 %v600, %v616
        %v630 = vmul.f32 %v601, %v621
        %v631 = vmul.f32 %v602, %v626
        %v632 = vadd.f32 %v628, %v629
        %v633 = vadd.f32 %v632, %v630
        %v634 = vadd.f32 %v633, %v631
        %v635 = vrot.slane %v634, 4
        %v636 = vadd.f32 %v634, %v635
        %v637 = vrot.slane %v636, 2
        %v638 = vadd.f32 %v636, %v637
        %v639 = vrot.slane %v638, 1
        %v640 = vadd.f32 %v638, %v639
        %642 = vset.pattern.permute.xlu0 0
        %643 = vperm.xlu0 %642, %v607
        %v644 = vpop.permute.xlu0 %643
        %v646 = vlaneseq
        %v647 = vshrl.u32 %v646, 7
        %v648 = vsub.s32 0, %v647
        %v649 = vrot.slane %v644, %v648
        %v650 = vadd.f32 %v640, %v649
        %v651 = vxor.u32 %v650, 2147483648
        %v652 = vmul.f32 %v651, 1.442695
        %v653 = vpow.pop %v652
        %v654 = vadd.f32 %v653, 1.0
        %v655 = vrcp.pop %v654
        %v656 = vmul.f32 1.0, %v655
        %657 = vst [vmem:[%s273] sm:$0x1] %v656
        %s658 = sand.u32 %s183, 1
        %s659 = scalar_lea.sflag [#allocation4], %s658
        %s660 = sand.u32 %s183, 1
        %s661 = scalar_lea.vmem [#allocation3], %s660
        // Predicated region
        $region49: #{tpu_custom_call.1} parent=47 // pred_check
          %p662 = pneg %p193
        $region50: #{tpu_custom_call.1} parent=47 // pred_check_branch
          %664 = sbr.rel (%p662) target = $region52
        $region51: #{tpu_custom_call.1} parent=47 // pred_region
          %s666 = ssub.s32 16, 16
          %667 = vsyncadd %s659, %s666
          %s668 = smul.addr %s23, 16
          %s669 = scalar_lea.hbm %s7, %s668
          %s671 = sshll.u32 %s661, 4
          %s672 = int_to_ptr.vmem [resolvable:$true] %s671
          %674 = dma.vmem_to_hbm [thread:$0]  %s672, 16, %s669, %s659
        $region52: #{tpu_custom_call.1} parent=47 // pred_fallthru
          _
      $region48: #{tpu_custom_call.1} parent=5 // pred_fallthru
        _
      %p675 = scmp.le.s32.totalorder 2, %s18
      // Predicated region
      $region53: #{tpu_custom_call.1} parent=5 // pred_check
        %p676 = pneg %p675
      $region54: #{tpu_custom_call.1} parent=5 // pred_check_branch
        %678 = sbr.rel (%p676) target = $region56
      $region55: #{tpu_custom_call.1} parent=5 // pred_region
        %s679 = ssub.s32 %s18, 2
        // Predicated region
        $region57: #{tpu_custom_call.1} parent=55 // pred_check
          %p680 = pneg %p199
        $region58: #{tpu_custom_call.1} parent=55 // pred_check_branch
          %682 = sbr.rel (%p680) target = $region60
        $region59: #{tpu_custom_call.1} parent=55 // pred_region
          %s683 = sand.u32 %s184, 1
          %s684 = scalar_lea.sflag [#allocation4], %s683
          %s685 = sand.u32 %s184, 1
          %s686 = scalar_lea.vmem [#allocation3], %s685
          %687 = dma.done %s684, 16
        $region60: #{tpu_custom_call.1} parent=55 // pred_fallthru
          _
      $region56: #{tpu_custom_call.1} parent=5 // pred_fallthru
        _
    $region6: #{tpu_custom_call.1} parent=1 // loop_footer
      %s22 = sadd.s32 1, %s18
    $region7: #{tpu_custom_call.1} parent=1 // loop_footer_branch
      %17 = sbr.rel target = $region3
    $region8: #{tpu_custom_call.1} parent=1 // loop_exit
      _
    %688 = vsyncpa [#allocation4], 1
    %s689 = scalar_lea.sflag [#allocation4], 1
    %690 = vsyncpa %s689, 1

</llo_original>
